<compile_context>
chip_gen: v6e
topology: v6e:2x2x1
jax: 0.10.0
libtpu: 0.0.40
codegen_flags: <defaults>
</compile_context>

<pallas_src>
import functools

import jax
import jax.numpy as jnp
from jax.experimental import pallas as pl
from jax.experimental.pallas import tpu as pltpu

LANE = 128      # lane width (last-dim alignment target)
SUBLANE = 8     # sublane alignment for the second-to-last dim


def _round_up(x, m):
    return ((x + m - 1) // m) * m


def mlp_kernel(x_ref, w1_ref, b1_ref, w2_ref, b2_ref,
               w3_ref, b3_ref, w4_ref, b4_ref, out_ref):
    """Fused 4-layer MLP for one (TB, 784) batch tile.

    All matmuls run on the MXU with f32 accumulation; bias + ReLU epilogue is
    f32 on the VPU. Weight/bias refs are whole, VMEM-resident, lane-padded
    arrays (constant index_maps -> DMA'd once, reused across batch tiles).
    """
    cdt = w1_ref.dtype  # matmul-input dtype (f32 or bf16)

    # Layer 1: Linear(784 -> 128) + ReLU  (ragged 784 contraction, MXU-masked)
    h = jnp.dot(x_ref[...], w1_ref[...], preferred_element_type=jnp.float32)
    h = jnp.maximum(h + b1_ref[...], 0.0)

    # Layer 2: Linear(128 -> 64p) + ReLU
    h = jnp.dot(h.astype(cdt), w2_ref[...], preferred_element_type=jnp.float32)
    h = jnp.maximum(h + b2_ref[...], 0.0)

    # Layer 3: Linear(64p -> 32p) + ReLU
    h = jnp.dot(h.astype(cdt), w3_ref[...], preferred_element_type=jnp.float32)
    h = jnp.maximum(h + b3_ref[...], 0.0)

    # Output layer: Linear(32p -> 10p), no activation. Output tile is lane-dense
    # (TB, 128); the real logits live in columns [:10].
    logits = jnp.dot(h.astype(cdt), w4_ref[...], preferred_element_type=jnp.float32)
    out_ref[...] = (logits + b4_ref[...]).astype(out_ref.dtype)


def mlp_forward(x_nchw, params, *, compute_dtype=jnp.bfloat16, tb_max=None):
    """x_nchw: (B, 1, 28, 28) float32. Returns logits (B, 10) float32.

    compute_dtype: dtype of the matmul inputs (bf16 recommended on all TPU
    generations; f32 for exact parity). Accumulation is always f32.
    """
    w1, b1, w2, b2, w3, b3, w4, b4 = params
    B = x_nchw.shape[0]
    x = x_nchw.reshape(B, -1)                        # nn.Flatten(): row-major over C*H*W
    K = x.shape[1]                                   # 784 (NOT padded -- see header)
    n_out = w4.shape[1]                              # 10

    compute_dtype = jnp.dtype(compute_dtype)
    out_dtype = jnp.float32 if compute_dtype == jnp.float32 else jnp.bfloat16

    # ---- Batch tiling. Large tiles amortize the ~0.35 us/step overhead; when a
    # single tile would cover a large batch, split it in two so both v7x TCs work.
    if tb_max is None:
        tb_max = 4096 if compute_dtype.itemsize <= 2 else 2048
    B8 = _round_up(B, SUBLANE)
    TB = min(tb_max, B8)
    if TB == B8 and B8 >= 1024:                      # enough work for two tiles (v7x megacore)
        TB = _round_up(pl.cdiv(B8, 2), SUBLANE)
    Bp = _round_up(B8, TB)                           # padded batch, multiple of TB

    # ---- Lane-padded feature dims for layers 2-4 (zeros in padded lanes are inert:
    # zero weight rows/cols, zero bias lanes, relu(0)=0).
    H1p = _round_up(w1.shape[1], LANE)               # 128
    H2p = _round_up(w2.shape[1], LANE)               # 64  -> 128
    H3p = _round_up(w3.shape[1], LANE)               # 32  -> 128
    Np = _round_up(n_out, LANE)                      # 10  -> 128 (lane-dense output)

    def pad2(a, rows, cols, dtype):
        return jnp.pad(a, ((0, rows - a.shape[0]), (0, cols - a.shape[1]))).astype(dtype)

    # Only the ragged final batch tile is padded (often a no-op); the
    # reshape/pad/cast of x is allowed to fuse into the kernel's input DMA
    # (allow_input_fusion) so no second full HBM copy of x is materialized.
    x_in = x
    if Bp > B:
        x_in = jnp.pad(x_in, ((0, Bp - B), (0, 0)))
    x_in = x_in.astype(compute_dtype)

    w1p = pad2(w1, K, H1p, compute_dtype)            # (784, 128) -- contraction unpadded
    w2p = pad2(w2, H1p, H2p, compute_dtype)
    w3p = pad2(w3, H2p, H3p, compute_dtype)
    w4p = pad2(w4, H3p, Np, compute_dtype)
    b1p = pad2(b1, 1, H1p, jnp.float32)              # biases stay f32 for the VPU epilogue
    b2p = pad2(b2, 1, H2p, jnp.float32)
    b3p = pad2(b3, 1, H3p, jnp.float32)
    b4p = pad2(b4, 1, Np, jnp.float32)

    # Weights/biases: full-shape blocks with constant index_map -> VMEM-resident,
    # no re-DMA across batch-tile grid steps. (Single-buffering them would only
    # save ~1 MiB of VMEM, not needed at this footprint.)
    resident = lambda a: pl.BlockSpec(a.shape, lambda i: (0, 0))

    flops = 2 * Bp * (K * H1p + H1p * H2p + H2p * H3p + H3p * Np)
    bytes_accessed = (x_in.size * x_in.dtype.itemsize
                      + sum(a.size * a.dtype.itemsize
                            for a in (w1p, b1p, w2p, b2p, w3p, b3p, w4p, b4p))
                      + Bp * Np * jnp.dtype(out_dtype).itemsize)

    out = pl.pallas_call(
        mlp_kernel,
        out_shape=jax.ShapeDtypeStruct((Bp, Np), out_dtype),
        grid_spec=pltpu.PrefetchScalarGridSpec(
            num_scalar_prefetch=0,
            grid=(Bp // TB,),
            in_specs=[
                pl.BlockSpec((TB, K), lambda i: (i, 0)),   # pipelined x tile (no K pad)
                resident(w1p), resident(b1p),
                resident(w2p), resident(b2p),
                resident(w3p), resident(b3p),
                resident(w4p), resident(b4p),
            ],
            out_specs=pl.BlockSpec((TB, Np), lambda i: (i, 0)),
        ),
        compiler_params=pltpu.CompilerParams(
            dimension_semantics=("parallel",),          # shard batch tiles across TCs (v7x)
            allow_input_fusion=[True] + [False] * 8,    # fuse x reshape/pad/cast into input DMA
            vmem_limit_bytes=32 * 1024 * 1024,          # fits v5e/v6e/v7x; footprint ~13-17 MiB
        ),
        cost_estimate=pl.CostEstimate(flops=int(flops), transcendentals=0,
                                      bytes_accessed=int(bytes_accessed)),
    )(x_in, w1p, b1p, w2p, b2p, w3p, b3p, w4p, b4p)

    return out[:B, :n_out].astype(jnp.float32)


def init_params(key, hidden_dims=(128, 64, 32)):
    """Deterministic synthetic parameters. Weights stored as (in, out)."""
    dims = [28 * 28, hidden_dims[0], hidden_dims[1], hidden_dims[2], 10]
    params = []
    for i in range(4):
        key, kw, kb = jax.random.split(key, 3)
        fan_in = dims[i]
        scale = 1.0 / jnp.sqrt(fan_in)  # same scale family as torch Linear init
        w = jax.random.uniform(kw, (dims[i], dims[i + 1]),
                               minval=-scale, maxval=scale, dtype=jnp.float32)
        b = jax.random.uniform(kb, (1, dims[i + 1]),
                               minval=-scale, maxval=scale, dtype=jnp.float32)
        params += [w, b]
    return params


if __name__ == "__main__":
    key = jax.random.PRNGKey(0)
    k_x, k_p = jax.random.split(key)

    hidden_dims = (128, 64, 32)
    batch = 8
    x = jax.random.normal(k_x, (batch, 1, 28, 28), dtype=jnp.float32)
    params = init_params(k_p, hidden_dims)

    # ---- f32 path: must match the pure-JAX reference (PyTorch semantics).
    fwd_f32 = jax.jit(functools.partial(mlp_forward, compute_dtype=jnp.float32))
    logits = fwd_f32(x, params)
    jax.block_until_ready(logits)

    w1, b1, w2, b2, w3, b3, w4, b4 = params
    h = x.reshape(batch, -1)
    h = jnp.maximum(h @ w1 + b1, 0.0)
    h = jnp.maximum(h @ w2 + b2, 0.0)
    h = jnp.maximum(h @ w3 + b3, 0.0)
    ref = h @ w4 + b4
    assert logits.shape == (batch, 10)
    assert jnp.allclose(logits, ref, atol=1e-4, rtol=1e-4)

    # ---- bf16 matmul-input fast path (default; f32 accumulation, bf16 writeback).
    fwd_bf16 = jax.jit(functools.partial(mlp_forward, compute_dtype=jnp.bfloat16))
    logits_bf16 = fwd_bf16(x, params)
    jax.block_until_ready(logits_bf16)

    bf = jnp.bfloat16
    hb = x.reshape(batch, -1).astype(bf)
    hb = jnp.maximum(jnp.dot(hb, w1.astype(bf), preferred_element_type=jnp.float32) + b1, 0.0)
    hb = jnp.maximum(jnp.dot(hb.astype(bf), w2.astype(bf), preferred_element_type=jnp.float32) + b2, 0.0)
    hb = jnp.maximum(jnp.dot(hb.astype(bf), w3.astype(bf), preferred_element_type=jnp.float32) + b3, 0.0)
    ref_bf16 = jnp.dot(hb.astype(bf), w4.astype(bf), preferred_element_type=jnp.float32) + b4
    assert logits_bf16.shape == (batch, 10)
    assert jnp.allclose(logits_bf16, ref_bf16, atol=5e-2, rtol=5e-2)

    print("KERNEL_OK")
</pallas_src>

<mosaic_0001>
module attributes {stable_mosaic.version = 11 : i64} {
  func.func @mlp_kernel(%arg0: i32, %arg1: memref<8x784xf32, #tpu.memory_space<vmem>>, %arg2: memref<784x128xf32, #tpu.memory_space<vmem>>, %arg3: memref<1x128xf32, #tpu.memory_space<vmem>>, %arg4: memref<128x128xf32, #tpu.memory_space<vmem>>, %arg5: memref<1x128xf32, #tpu.memory_space<vmem>>, %arg6: memref<128x128xf32, #tpu.memory_space<vmem>>, %arg7: memref<1x128xf32, #tpu.memory_space<vmem>>, %arg8: memref<128x128xf32, #tpu.memory_space<vmem>>, %arg9: memref<1x128xf32, #tpu.memory_space<vmem>>, %arg10: memref<8x128xf32, #tpu.memory_space<vmem>>) attributes {dimension_semantics = [#tpu.dimension_semantics<parallel>], iteration_bounds = array<i64: 1>, scalar_prefetch = 0 : i64, scratch_operands = 0 : i64, tpu.core_type = #tpu.core_type<tc>, window_params = [{transform_indices = @transform_0, window_bounds = array<i64: 8, 784>}, {pipeline_mode = #tpu.pipeline_mode<synchronous>, transform_indices = @transform_1, window_bounds = array<i64: 784, 128>}, {pipeline_mode = #tpu.pipeline_mode<synchronous>, transform_indices = @transform_2, window_bounds = array<i64: 1, 128>}, {pipeline_mode = #tpu.pipeline_mode<synchronous>, transform_indices = @transform_3, window_bounds = array<i64: 128, 128>}, {pipeline_mode = #tpu.pipeline_mode<synchronous>, transform_indices = @transform_4, window_bounds = array<i64: 1, 128>}, {pipeline_mode = #tpu.pipeline_mode<synchronous>, transform_indices = @transform_5, window_bounds = array<i64: 128, 128>}, {pipeline_mode = #tpu.pipeline_mode<synchronous>, transform_indices = @transform_6, window_bounds = array<i64: 1, 128>}, {pipeline_mode = #tpu.pipeline_mode<synchronous>, transform_indices = @transform_7, window_bounds = array<i64: 128, 128>}, {pipeline_mode = #tpu.pipeline_mode<synchronous>, transform_indices = @transform_8, window_bounds = array<i64: 1, 128>}, {transform_indices = @transform_9, window_bounds = array<i64: 8, 128>}]} {
    %c0 = arith.constant 0 : index
    %c0_0 = arith.constant 0 : index
    %0 = vector.load %arg1[%c0, %c0_0] : memref<8x784xf32, #tpu.memory_space<vmem>>, vector<8x784xf32>
    %c0_1 = arith.constant 0 : index
    %c0_2 = arith.constant 0 : index
    %1 = vector.load %arg2[%c0_1, %c0_2] : memref<784x128xf32, #tpu.memory_space<vmem>>, vector<784x128xf32>
    %cst = arith.constant dense<0.000000e+00> : vector<8x128xf32>
    %2 = tpu.matmul %0, %1, %cst {dimension_numbers = #tpu.dot_dimension_numbers<[1], [0], [0], [1], [0, 0, 1, 1], [], []>} : vector<8x784xf32>, vector<784x128xf32>, vector<8x128xf32> -> vector<8x128xf32>
    %c0_3 = arith.constant 0 : index
    %c0_4 = arith.constant 0 : index
    %3 = vector.load %arg3[%c0_3, %c0_4] : memref<1x128xf32, #tpu.memory_space<vmem>>, vector<1x128xf32>
    %4 = vector.broadcast %3 : vector<1x128xf32> to vector<8x128xf32>
    %5 = arith.addf %2, %4 : vector<8x128xf32>
    %cst_5 = arith.constant 0.000000e+00 : f32
    %6 = vector.broadcast %cst_5 : f32 to vector<8x128xf32>
    %7 = arith.maximumf %5, %6 : vector<8x128xf32>
    %c0_6 = arith.constant 0 : index
    %c0_7 = arith.constant 0 : index
    %8 = vector.load %arg4[%c0_6, %c0_7] : memref<128x128xf32, #tpu.memory_space<vmem>>, vector<128x128xf32>
    %cst_8 = arith.constant dense<0.000000e+00> : vector<8x128xf32>
    %9 = tpu.matmul %7, %8, %cst_8 {dimension_numbers = #tpu.dot_dimension_numbers<[1], [0], [0], [1], [0, 0, 1, 1], [], []>} : vector<8x128xf32>, vector<128x128xf32>, vector<8x128xf32> -> vector<8x128xf32>
    %c0_9 = arith.constant 0 : index
    %c0_10 = arith.constant 0 : index
    %10 = vector.load %arg5[%c0_9, %c0_10] : memref<1x128xf32, #tpu.memory_space<vmem>>, vector<1x128xf32>
    %11 = vector.broadcast %10 : vector<1x128xf32> to vector<8x128xf32>
    %12 = arith.addf %9, %11 : vector<8x128xf32>
    %cst_11 = arith.constant 0.000000e+00 : f32
    %13 = vector.broadcast %cst_11 : f32 to vector<8x128xf32>
    %14 = arith.maximumf %12, %13 : vector<8x128xf32>
    %c0_12 = arith.constant 0 : index
    %c0_13 = arith.constant 0 : index
    %15 = vector.load %arg6[%c0_12, %c0_13] : memref<128x128xf32, #tpu.memory_space<vmem>>, vector<128x128xf32>
    %cst_14 = arith.constant dense<0.000000e+00> : vector<8x128xf32>
    %16 = tpu.matmul %14, %15, %cst_14 {dimension_numbers = #tpu.dot_dimension_numbers<[1], [0], [0], [1], [0, 0, 1, 1], [], []>} : vector<8x128xf32>, vector<128x128xf32>, vector<8x128xf32> -> vector<8x128xf32>
    %c0_15 = arith.constant 0 : index
    %c0_16 = arith.constant 0 : index
    %17 = vector.load %arg7[%c0_15, %c0_16] : memref<1x128xf32, #tpu.memory_space<vmem>>, vector<1x128xf32>
    %18 = vector.broadcast %17 : vector<1x128xf32> to vector<8x128xf32>
    %19 = arith.addf %16, %18 : vector<8x128xf32>
    %cst_17 = arith.constant 0.000000e+00 : f32
    %20 = vector.broadcast %cst_17 : f32 to vector<8x128xf32>
    %21 = arith.maximumf %19, %20 : vector<8x128xf32>
    %c0_18 = arith.constant 0 : index
    %c0_19 = arith.constant 0 : index
    %22 = vector.load %arg8[%c0_18, %c0_19] : memref<128x128xf32, #tpu.memory_space<vmem>>, vector<128x128xf32>
    %cst_20 = arith.constant dense<0.000000e+00> : vector<8x128xf32>
    %23 = tpu.matmul %21, %22, %cst_20 {dimension_numbers = #tpu.dot_dimension_numbers<[1], [0], [0], [1], [0, 0, 1, 1], [], []>} : vector<8x128xf32>, vector<128x128xf32>, vector<8x128xf32> -> vector<8x128xf32>
    %c0_21 = arith.constant 0 : index
    %c0_22 = arith.constant 0 : index
    %24 = vector.load %arg9[%c0_21, %c0_22] : memref<1x128xf32, #tpu.memory_space<vmem>>, vector<1x128xf32>
    %25 = vector.broadcast %24 : vector<1x128xf32> to vector<8x128xf32>
    %26 = arith.addf %23, %25 : vector<8x128xf32>
    %c0_23 = arith.constant 0 : index
    %c0_24 = arith.constant 0 : index
    %27 = vector.load %arg10[%c0_23, %c0_24] : memref<8x128xf32, #tpu.memory_space<vmem>>, vector<8x128xf32>
    tpu.vector_store %arg10[%c0_23, %c0_24], %26 {strides = array<i32>} : memref<8x128xf32, #tpu.memory_space<vmem>>, vector<8x128xf32>,
    return
  }
  func.func @transform_0(%arg0: i32) -> (i32, i32) {
    %c0_i32 = arith.constant 0 : i32
    %c0_i32_0 = arith.constant 0 : i32
    return %arg0, %c0_i32 : i32, i32
  }
  func.func @transform_1(%arg0: i32) -> (i32, i32) {
    %c0_i32 = arith.constant 0 : i32
    %c0_i32_0 = arith.constant 0 : i32
    %c0_i32_1 = arith.constant 0 : i32
    return %c0_i32, %c0_i32_0 : i32, i32
  }
  func.func @transform_2(%arg0: i32) -> (i32, i32) {
    %c0_i32 = arith.constant 0 : i32
    %c0_i32_0 = arith.constant 0 : i32
    %c0_i32_1 = arith.constant 0 : i32
    return %c0_i32, %c0_i32_0 : i32, i32
  }
  func.func @transform_3(%arg0: i32) -> (i32, i32) {
    %c0_i32 = arith.constant 0 : i32
    %c0_i32_0 = arith.constant 0 : i32
    %c0_i32_1 = arith.constant 0 : i32
    return %c0_i32, %c0_i32_0 : i32, i32
  }
  func.func @transform_4(%arg0: i32) -> (i32, i32) {
    %c0_i32 = arith.constant 0 : i32
    %c0_i32_0 = arith.constant 0 : i32
    %c0_i32_1 = arith.constant 0 : i32
    return %c0_i32, %c0_i32_0 : i32, i32
  }
  func.func @transform_5(%arg0: i32) -> (i32, i32) {
    %c0_i32 = arith.constant 0 : i32
    %c0_i32_0 = arith.constant 0 : i32
    %c0_i32_1 = arith.constant 0 : i32
    return %c0_i32, %c0_i32_0 : i32, i32
  }
  func.func @transform_6(%arg0: i32) -> (i32, i32) {
    %c0_i32 = arith.constant 0 : i32
    %c0_i32_0 = arith.constant 0 : i32
    %c0_i32_1 = arith.constant 0 : i32
    return %c0_i32, %c0_i32_0 : i32, i32
  }
  func.func @transform_7(%arg0: i32) -> (i32, i32) {
    %c0_i32 = arith.constant 0 : i32
    %c0_i32_0 = arith.constant 0 : i32
    %c0_i32_1 = arith.constant 0 : i32
    return %c0_i32, %c0_i32_0 : i32, i32
  }
  func.func @transform_8(%arg0: i32) -> (i32, i32) {
    %c0_i32 = arith.constant 0 : i32
    %c0_i32_0 = arith.constant 0 : i32
    %c0_i32_1 = arith.constant 0 : i32
    return %c0_i32, %c0_i32_0 : i32, i32
  }
  func.func @transform_9(%arg0: i32) -> (i32, i32) {
    %c0_i32 = arith.constant 0 : i32
    %c0_i32_0 = arith.constant 0 : i32
    return %arg0, %c0_i32 : i32, i32
  }
}

</mosaic_0001>

<llo_original>
// kernel: mlp_forward.1
$region0: #{mlp_forward.1}
  #allocation0 [shape = 'u32[]', space=smem, size = 0x4, offset = 0x4, fixed_abs, tag = 'smem constant byte address 0x4 - core index']
  #allocation1 [shape = 'u32[144,128]{1,0:T(1,128)}', space=vmem, size = 0x12000, scoped, tag = 'internal scratch']
  %s0 = inlined_call_operand.vmem [shape: f32[8,784], index: 0, kind: input, shape index: {}]
  %s1 = inlined_call_operand.vmem [shape: f32[784,128], index: 1, kind: input, shape index: {}]
  %s2 = inlined_call_operand.vmem [shape: f32[1,128], index: 2, kind: input, shape index: {}]
  %s3 = inlined_call_operand.vmem [shape: f32[128,128], index: 3, kind: input, shape index: {}]
  %s4 = inlined_call_operand.vmem [shape: f32[1,128], index: 4, kind: input, shape index: {}]
  %s5 = inlined_call_operand.vmem [shape: f32[128,128], index: 5, kind: input, shape index: {}]
  %s6 = inlined_call_operand.vmem [shape: f32[1,128], index: 6, kind: input, shape index: {}]
  %s7 = inlined_call_operand.vmem [shape: f32[128,128], index: 7, kind: input, shape index: {}]
  %s8 = inlined_call_operand.vmem [shape: f32[1,128], index: 8, kind: input, shape index: {}]
  %s9 = inlined_call_operand.hbm [shape: f32[8,128], index: 9, kind: output, shape index: {}]
  %s10 = sld [smem:[#allocation0]]
  $region46: #{mlp_forward.1} parent=0
    _
  %s12 = ssub.s32 1, %s10
  %s13 = scalar_select 0, %s12, %s10
  $region1: #{mlp_forward.1} parent=0
    #allocation2 [shape = 'u8[4096]{0}', space=vmem, size = 0x1000, scoped, tag = 'output window, operand 0, single buffered']
    #allocation3 [shape = 's32[1]{0}', space=sflag, size = 0x4, scoped, tag = 'scoped memory for mlp_forward.1']
    %14 = vsyncpa [#allocation3], 0
    // Predicated region
    $region2: #{mlp_forward.1} parent=1 // pred_check
      _
    $region3: #{mlp_forward.1} parent=1 // pred_check_branch
      %16 = sbr.rel (0) target = $region5
    $region4: #{mlp_forward.1} parent=1 // pred_region
      _
    $region5: #{mlp_forward.1} parent=1 // pred_fallthru
      _
    // Predicated region
    $region6: #{mlp_forward.1} parent=1 // pred_check
      _
    $region7: #{mlp_forward.1} parent=1 // pred_check_branch
      %18 = sbr.rel (0) target = $region9
    $region8: #{mlp_forward.1} parent=1 // pred_region
      _
    $region9: #{mlp_forward.1} parent=1 // pred_fallthru
      _
    // Predicated region
    $region10: #{mlp_forward.1} parent=1 // pred_check
      _
    $region11: #{mlp_forward.1} parent=1 // pred_check_branch
      %20 = sbr.rel (0) target = $region13
    $region12: #{mlp_forward.1} parent=1 // pred_region
      _
    $region13: #{mlp_forward.1} parent=1 // pred_fallthru
      _
    // Predicated region
    $region14: #{mlp_forward.1} parent=1 // pred_check
      _
    $region15: #{mlp_forward.1} parent=1 // pred_check_branch
      %22 = sbr.rel (0) target = $region17
    $region16: #{mlp_forward.1} parent=1 // pred_region
      _
    $region17: #{mlp_forward.1} parent=1 // pred_fallthru
      _
    // Predicated region
    $region18: #{mlp_forward.1} parent=1 // pred_check
      _
    $region19: #{mlp_forward.1} parent=1 // pred_check_branch
      %24 = sbr.rel (0) target = $region21
    $region20: #{mlp_forward.1} parent=1 // pred_region
      _
    $region21: #{mlp_forward.1} parent=1 // pred_fallthru
      _
    // Predicated region
    $region22: #{mlp_forward.1} parent=1 // pred_check
      _
    $region23: #{mlp_forward.1} parent=1 // pred_check_branch
      %26 = sbr.rel (0) target = $region25
    $region24: #{mlp_forward.1} parent=1 // pred_region
      _
    $region25: #{mlp_forward.1} parent=1 // pred_fallthru
      _
    // Predicated region
    $region26: #{mlp_forward.1} parent=1 // pred_check
      _
    $region27: #{mlp_forward.1} parent=1 // pred_check_branch
      %28 = sbr.rel (0) target = $region29
    $region28: #{mlp_forward.1} parent=1 // pred_region
      _
    $region29: #{mlp_forward.1} parent=1 // pred_fallthru
      _
    // Predicated region
    $region30: #{mlp_forward.1} parent=1 // pred_check
      _
    $region31: #{mlp_forward.1} parent=1 // pred_check_branch
      %30 = sbr.rel (0) target = $region33
    $region32: #{mlp_forward.1} parent=1 // pred_region
      _
    $region33: #{mlp_forward.1} parent=1 // pred_fallthru
      _
    // Predicated region
    $region34: #{mlp_forward.1} parent=1 // pred_check
      _
    $region35: #{mlp_forward.1} parent=1 // pred_check_branch
      %32 = sbr.rel (0) target = $region37
    $region36: #{mlp_forward.1} parent=1 // pred_region
      _
    $region37: #{mlp_forward.1} parent=1 // pred_fallthru
      _
    %v33 = vld [vmem:[%s0] sm:$0xff]
    %v34 = vld [vmem:[%s0 + $0x8] sm:$0xff]
    %v35 = vld [vmem:[%s0 + $0x10] sm:$0xff]
    %v36 = vld [vmem:[%s0 + $0x18] sm:$0xff]
    %v37 = vld [vmem:[%s0 + $0x20] sm:$0xff]
    %v38 = vld [vmem:[%s0 + $0x28] sm:$0xff]
    %v39 = vld [vmem:[%s0 + $0x30] sm:$0xff]
    %v40 = vld [vmem:[%s1] sm:$0xff]
    %v41 = vld [vmem:[%s1 + $0x8] sm:$0xff]
    %v42 = vld [vmem:[%s1 + $0x10] sm:$0xff]
    %v43 = vld [vmem:[%s1 + $0x18] sm:$0xff]
    %v44 = vld [vmem:[%s1 + $0x20] sm:$0xff]
    %v45 = vld [vmem:[%s1 + $0x28] sm:$0xff]
    %v46 = vld [vmem:[%s1 + $0x30] sm:$0xff]
    %v47 = vld [vmem:[%s1 + $0x38] sm:$0xff]
    %v48 = vld [vmem:[%s1 + $0x40] sm:$0xff]
    %v49 = vld [vmem:[%s1 + $0x48] sm:$0xff]
    %v50 = vld [vmem:[%s1 + $0x50] sm:$0xff]
    %v51 = vld [vmem:[%s1 + $0x58] sm:$0xff]
    %v52 = vld [vmem:[%s1 + $0x60] sm:$0xff]
    %v53 = vld [vmem:[%s1 + $0x68] sm:$0xff]
    %v54 = vld [vmem:[%s1 + $0x70] sm:$0xff]
    %v55 = vld [vmem:[%s1 + $0x78] sm:$0xff]
    %v56 = vld [vmem:[%s1 + $0x80] sm:$0xff]
    %v57 = vld [vmem:[%s1 + $0x88] sm:$0xff]
    %v58 = vld [vmem:[%s1 + $0x90] sm:$0xff]
    %v59 = vld [vmem:[%s1 + $0x98] sm:$0xff]
    %v60 = vld [vmem:[%s1 + $0xa0] sm:$0xff]
    %v61 = vld [vmem:[%s1 + $0xa8] sm:$0xff]
    %v62 = vld [vmem:[%s1 + $0xb0] sm:$0xff]
    %v63 = vld [vmem:[%s1 + $0xb8] sm:$0xff]
    %v64 = vld [vmem:[%s1 + $0xc0] sm:$0xff]
    %v65 = vld [vmem:[%s1 + $0xc8] sm:$0xff]
    %v66 = vld [vmem:[%s1 + $0xd0] sm:$0xff]
    %v67 = vld [vmem:[%s1 + $0xd8] sm:$0xff]
    %v68 = vld [vmem:[%s1 + $0xe0] sm:$0xff]
    %v69 = vld [vmem:[%s1 + $0xe8] sm:$0xff]
    %v70 = vld [vmem:[%s1 + $0xf0] sm:$0xff]
    %v71 = vld [vmem:[%s1 + $0xf8] sm:$0xff]
    %v72 = vld [vmem:[%s1 + $0x100] sm:$0xff]
    %v73 = vld [vmem:[%s1 + $0x108] sm:$0xff]
    %v74 = vld [vmem:[%s1 + $0x110] sm:$0xff]
    %v75 = vld [vmem:[%s1 + $0x118] sm:$0xff]
    %v76 = vld [vmem:[%s1 + $0x120] sm:$0xff]
    %v77 = vld [vmem:[%s1 + $0x128] sm:$0xff]
    %v78 = vld [vmem:[%s1 + $0x130] sm:$0xff]
    %v79 = vld [vmem:[%s1 + $0x138] sm:$0xff]
    %v80 = vld [vmem:[%s1 + $0x140] sm:$0xff]
    %v81 = vld [vmem:[%s1 + $0x148] sm:$0xff]
    %v82 = vld [vmem:[%s1 + $0x150] sm:$0xff]
    %v83 = vld [vmem:[%s1 + $0x158] sm:$0xff]
    %v84 = vld [vmem:[%s1 + $0x160] sm:$0xff]
    %v85 = vld [vmem:[%s1 + $0x168] sm:$0xff]
    %v86 = vld [vmem:[%s1 + $0x170] sm:$0xff]
    %v87 = vld [vmem:[%s1 + $0x178] sm:$0xff]
    %v88 = vld [vmem:[%s1 + $0x180] sm:$0xff]
    %v89 = vld [vmem:[%s1 + $0x188] sm:$0xff]
    %v90 = vld [vmem:[%s1 + $0x190] sm:$0xff]
    %v91 = vld [vmem:[%s1 + $0x198] sm:$0xff]
    %v92 = vld [vmem:[%s1 + $0x1a0] sm:$0xff]
    %v93 = vld [vmem:[%s1 + $0x1a8] sm:$0xff]
    %v94 = vld [vmem:[%s1 + $0x1b0] sm:$0xff]
    %v95 = vld [vmem:[%s1 + $0x1b8] sm:$0xff]
    %v96 = vld [vmem:[%s1 + $0x1c0] sm:$0xff]
    %v97 = vld [vmem:[%s1 + $0x1c8] sm:$0xff]
    %v98 = vld [vmem:[%s1 + $0x1d0] sm:$0xff]
    %v99 = vld [vmem:[%s1 + $0x1d8] sm:$0xff]
    %v100 = vld [vmem:[%s1 + $0x1e0] sm:$0xff]
    %v101 = vld [vmem:[%s1 + $0x1e8] sm:$0xff]
    %v102 = vld [vmem:[%s1 + $0x1f0] sm:$0xff]
    %v103 = vld [vmem:[%s1 + $0x1f8] sm:$0xff]
    %v104 = vld [vmem:[%s1 + $0x200] sm:$0xff]
    %v105 = vld [vmem:[%s1 + $0x208] sm:$0xff]
    %v106 = vld [vmem:[%s1 + $0x210] sm:$0xff]
    %v107 = vld [vmem:[%s1 + $0x218] sm:$0xff]
    %v108 = vld [vmem:[%s1 + $0x220] sm:$0xff]
    %v109 = vld [vmem:[%s1 + $0x228] sm:$0xff]
    %v110 = vld [vmem:[%s1 + $0x230] sm:$0xff]
    %v111 = vld [vmem:[%s1 + $0x238] sm:$0xff]
    %v112 = vld [vmem:[%s1 + $0x240] sm:$0xff]
    %v113 = vld [vmem:[%s1 + $0x248] sm:$0xff]
    %v114 = vld [vmem:[%s1 + $0x250] sm:$0xff]
    %v115 = vld [vmem:[%s1 + $0x258] sm:$0xff]
    %v116 = vld [vmem:[%s1 + $0x260] sm:$0xff]
    %v117 = vld [vmem:[%s1 + $0x268] sm:$0xff]
    %v118 = vld [vmem:[%s1 + $0x270] sm:$0xff]
    %v119 = vld [vmem:[%s1 + $0x278] sm:$0xff]
    %v120 = vld [vmem:[%s1 + $0x280] sm:$0xff]
    %v121 = vld [vmem:[%s1 + $0x288] sm:$0xff]
    %v122 = vld [vmem:[%s1 + $0x290] sm:$0xff]
    %v123 = vld [vmem:[%s1 + $0x298] sm:$0xff]
    %v124 = vld [vmem:[%s1 + $0x2a0] sm:$0xff]
    %v125 = vld [vmem:[%s1 + $0x2a8] sm:$0xff]
    %v126 = vld [vmem:[%s1 + $0x2b0] sm:$0xff]
    %v127 = vld [vmem:[%s1 + $0x2b8] sm:$0xff]
    %v128 = vld [vmem:[%s1 + $0x2c0] sm:$0xff]
    %v129 = vld [vmem:[%s1 + $0x2c8] sm:$0xff]
    %v130 = vld [vmem:[%s1 + $0x2d0] sm:$0xff]
    %v131 = vld [vmem:[%s1 + $0x2d8] sm:$0xff]
    %v132 = vld [vmem:[%s1 + $0x2e0] sm:$0xff]
    %v133 = vld [vmem:[%s1 + $0x2e8] sm:$0xff]
    %v134 = vld [vmem:[%s1 + $0x2f0] sm:$0xff]
    %v135 = vld [vmem:[%s1 + $0x2f8] sm:$0xff]
    %v136 = vld [vmem:[%s1 + $0x300] sm:$0xff]
    %v137 = vld [vmem:[%s1 + $0x308] sm:$0xff]
    %v138 = vld [vmem:[%s2] sm:$0x1]
    %v140 = vlaneseq
    %v141 = vshrl.u32 %v140, 7
    %v142 = vsub.s32 0, %v141
    %v143 = vrot.slane %v138, %v142
    %vm145 = vcmask 130048
    %v147 = vsel %vm145, %v39, 0
    %149 = vmatprep.subr.mxu0 0.0
    %150 = vmatpush1.msra.mxu0 %v55
    %151 = vmatprep.subr.mxu0 0.0
    %152 = vmatpush1.msra.mxu0 %v54
    %153 = vmatprep.subr.mxu0 0.0
    %154 = vmatpush1.msra.mxu0 %v53
    %155 = vmatprep.subr.mxu0 0.0
    %156 = vmatpush1.msra.mxu0 %v52
    %157 = vmatprep.subr.mxu0 0.0
    %158 = vmatpush1.msra.mxu0 %v51
    %159 = vmatprep.subr.mxu0 0.0
    %160 = vmatpush1.msra.mxu0 %v50
    %161 = vmatprep.subr.mxu0 0.0
    %162 = vmatpush1.msra.mxu0 %v49
    %163 = vmatprep.subr.mxu0 0.0
    %164 = vmatpush1.msra.mxu0 %v48
    %165 = vmatprep.subr.mxu0 0.0
    %166 = vmatpush1.msra.mxu0 %v47
    %167 = vmatprep.subr.mxu0 0.0
    %168 = vmatpush1.msra.mxu0 %v46
    %169 = vmatprep.subr.mxu0 0.0
    %170 = vmatpush1.msra.mxu0 %v45
    %171 = vmatprep.subr.mxu0 0.0
    %172 = vmatpush1.msra.mxu0 %v44
    %173 = vmatprep.subr.mxu0 0.0
    %174 = vmatpush1.msra.mxu0 %v43
    %175 = vmatprep.subr.mxu0 0.0
    %176 = vmatpush1.msra.mxu0 %v42
    %177 = vmatprep.subr.mxu0 0.0
    %178 = vmatpush1.msra.mxu0 %v41
    %179 = vmatprep.subr.mxu0 0.0
    %180 = vmatpush1.msra.mxu0 %v40
    %181 = vmatprep.subr.mxu0 0.0
    %182 = vmatpush2.msra.mxu0 %v71
    %183 = vmatprep.subr.mxu0 0.0
    %184 = vmatpush2.msra.mxu0 %v70
    %185 = vmatprep.subr.mxu0 0.0
    %186 = vmatpush2.msra.mxu0 %v69
    %187 = vmatprep.subr.mxu0 0.0
    %188 = vmatpush2.msra.mxu0 %v68
    %189 = vmatprep.subr.mxu0 0.0
    %190 = vmatpush2.msra.mxu0 %v67
    %191 = vmatprep.subr.mxu0 0.0
    %192 = vmatpush2.msra.mxu0 %v66
    %193 = vmatprep.subr.mxu0 0.0
    %194 = vmatpush2.msra.mxu0 %v65
    %195 = vmatprep.subr.mxu0 0.0
    %196 = vmatpush2.msra.mxu0 %v64
    %197 = vmatprep.subr.mxu0 0.0
    %198 = vmatpush2.msra.mxu0 %v63
    %199 = vmatprep.subr.mxu0 0.0
    %200 = vmatpush2.msra.mxu0 %v62
    %201 = vmatprep.subr.mxu0 0.0
    %202 = vmatpush2.msra.mxu0 %v61
    %203 = vmatprep.subr.mxu0 0.0
    %204 = vmatpush2.msra.mxu0 %v60
    %205 = vmatprep.subr.mxu0 0.0
    %206 = vmatpush2.msra.mxu0 %v59
    %207 = vmatprep.subr.mxu0 0.0
    %208 = vmatpush2.msra.mxu0 %v58
    %209 = vmatprep.subr.mxu0 0.0
    %210 = vmatpush2.msra.mxu0 %v57
    %211 = vmatprep.subr.mxu0 0.0
    %212 = vmatpush2.msra.mxu0 %v56
    %213 = vmatprep.mubr.f32.mxu0 %v34
    %214 = vmatmul.mubr.f32.gmra.mxu0 %v33
    %v215 = vpop.f32.mrf.mxu0
    %v216 = vadd.f32 %v143, %v215
    %v217 = vpop.f32.mrf.mxu0
    %218 = vdwg.mxu0
    %219 = vmatprep.subr.mxu0 0.0
    %220 = vmatpush1.msra.mxu0 %v87
    %221 = vmatprep.subr.mxu0 0.0
    %222 = vmatpush1.msra.mxu0 %v86
    %223 = vmatprep.subr.mxu0 0.0
    %224 = vmatpush1.msra.mxu0 %v85
    %225 = vmatprep.subr.mxu0 0.0
    %226 = vmatpush1.msra.mxu0 %v84
    %227 = vmatprep.subr.mxu0 0.0
    %228 = vmatpush1.msra.mxu0 %v83
    %229 = vmatprep.subr.mxu0 0.0
    %230 = vmatpush1.msra.mxu0 %v82
    %231 = vmatprep.subr.mxu0 0.0
    %232 = vmatpush1.msra.mxu0 %v81
    %233 = vmatprep.subr.mxu0 0.0
    %234 = vmatpush1.msra.mxu0 %v80
    %235 = vmatprep.subr.mxu0 0.0
    %236 = vmatpush1.msra.mxu0 %v79
    %237 = vmatprep.subr.mxu0 0.0
    %238 = vmatpush1.msra.mxu0 %v78
    %239 = vmatprep.subr.mxu0 0.0
    %240 = vmatpush1.msra.mxu0 %v77
    %241 = vmatprep.subr.mxu0 0.0
    %242 = vmatpush1.msra.mxu0 %v76
    %243 = vmatprep.subr.mxu0 0.0
    %244 = vmatpush1.msra.mxu0 %v75
    %245 = vmatprep.subr.mxu0 0.0
    %246 = vmatpush1.msra.mxu0 %v74
    %247 = vmatprep.subr.mxu0 0.0
    %248 = vmatpush1.msra.mxu0 %v73
    %249 = vmatprep.subr.mxu0 0.0
    %250 = vmatpush1.msra.mxu0 %v72
    %251 = vmatprep.subr.mxu0 0.0
    %252 = vmatpush2.msra.mxu0 %v103
    %253 = vmatprep.subr.mxu0 0.0
    %254 = vmatpush2.msra.mxu0 %v102
    %255 = vmatprep.subr.mxu0 0.0
    %256 = vmatpush2.msra.mxu0 %v101
    %257 = vmatprep.subr.mxu0 0.0
    %258 = vmatpush2.msra.mxu0 %v100
    %259 = vmatprep.subr.mxu0 0.0
    %260 = vmatpush2.msra.mxu0 %v99
    %261 = vmatprep.subr.mxu0 0.0
    %262 = vmatpush2.msra.mxu0 %v98
    %263 = vmatprep.subr.mxu0 0.0
    %264 = vmatpush2.msra.mxu0 %v97
    %265 = vmatprep.subr.mxu0 0.0
    %266 = vmatpush2.msra.mxu0 %v96
    %267 = vmatprep.subr.mxu0 0.0
    %268 = vmatpush2.msra.mxu0 %v95
    %269 = vmatprep.subr.mxu0 0.0
    %270 = vmatpush2.msra.mxu0 %v94
    %271 = vmatprep.subr.mxu0 0.0
    %272 = vmatpush2.msra.mxu0 %v93
    %273 = vmatprep.subr.mxu0 0.0
    %274 = vmatpush2.msra.mxu0 %v92
    %275 = vmatprep.subr.mxu0 0.0
    %276 = vmatpush2.msra.mxu0 %v91
    %277 = vmatprep.subr.mxu0 0.0
    %278 = vmatpush2.msra.mxu0 %v90
    %279 = vmatprep.subr.mxu0 0.0
    %280 = vmatpush2.msra.mxu0 %v89
    %281 = vmatprep.subr.mxu0 0.0
    %282 = vmatpush2.msra.mxu0 %v88
    %283 = vmatprep.mubr.f32.mxu0 %v36
    %284 = vmatmul.mubr.f32.gmra.mxu0 %v35
    %v285 = vpop.f32.mrf.mxu0
    %v286 = vadd.f32 %v216, %v285
    %v287 = vpop.f32.mrf.mxu0
    %288 = vdwg.mxu0
    %289 = vmatprep.subr.mxu0 0.0
    %290 = vmatpush1.msra.mxu0 %v119
    %291 = vmatprep.subr.mxu0 0.0
    %292 = vmatpush1.msra.mxu0 %v118
    %293 = vmatprep.subr.mxu0 0.0
    %294 = vmatpush1.msra.mxu0 %v117
    %295 = vmatprep.subr.mxu0 0.0
    %296 = vmatpush1.msra.mxu0 %v116
    %297 = vmatprep.subr.mxu0 0.0
    %298 = vmatpush1.msra.mxu0 %v115
    %299 = vmatprep.subr.mxu0 0.0
    %300 = vmatpush1.msra.mxu0 %v114
    %301 = vmatprep.subr.mxu0 0.0
    %302 = vmatpush1.msra.mxu0 %v113
    %303 = vmatprep.subr.mxu0 0.0
    %304 = vmatpush1.msra.mxu0 %v112
    %305 = vmatprep.subr.mxu0 0.0
    %306 = vmatpush1.msra.mxu0 %v111
    %307 = vmatprep.subr.mxu0 0.0
    %308 = vmatpush1.msra.mxu0 %v110
    %309 = vmatprep.subr.mxu0 0.0
    %310 = vmatpush1.msra.mxu0 %v109
    %311 = vmatprep.subr.mxu0 0.0
    %312 = vmatpush1.msra.mxu0 %v108
    %313 = vmatprep.subr.mxu0 0.0
    %314 = vmatpush1.msra.mxu0 %v107
    %315 = vmatprep.subr.mxu0 0.0
    %316 = vmatpush1.msra.mxu0 %v106
    %317 = vmatprep.subr.mxu0 0.0
    %318 = vmatpush1.msra.mxu0 %v105
    %319 = vmatprep.subr.mxu0 0.0
    %320 = vmatpush1.msra.mxu0 %v104
    %321 = vmatprep.subr.mxu0 0.0
    %322 = vmatpush2.msra.mxu0 %v135
    %323 = vmatprep.subr.mxu0 0.0
    %324 = vmatpush2.msra.mxu0 %v134
    %325 = vmatprep.subr.mxu0 0.0
    %326 = vmatpush2.msra.mxu0 %v133
    %327 = vmatprep.subr.mxu0 0.0
    %328 = vmatpush2.msra.mxu0 %v132
    %329 = vmatprep.subr.mxu0 0.0
    %330 = vmatpush2.msra.mxu0 %v131
    %331 = vmatprep.subr.mxu0 0.0
    %332 = vmatpush2.msra.mxu0 %v130
    %333 = vmatprep.subr.mxu0 0.0
    %334 = vmatpush2.msra.mxu0 %v129
    %335 = vmatprep.subr.mxu0 0.0
    %336 = vmatpush2.msra.mxu0 %v128
    %337 = vmatprep.subr.mxu0 0.0
    %338 = vmatpush2.msra.mxu0 %v127
    %339 = vmatprep.subr.mxu0 0.0
    %340 = vmatpush2.msra.mxu0 %v126
    %341 = vmatprep.subr.mxu0 0.0
    %342 = vmatpush2.msra.mxu0 %v125
    %343 = vmatprep.subr.mxu0 0.0
    %344 = vmatpush2.msra.mxu0 %v124
    %345 = vmatprep.subr.mxu0 0.0
    %346 = vmatpush2.msra.mxu0 %v123
    %347 = vmatprep.subr.mxu0 0.0
    %348 = vmatpush2.msra.mxu0 %v122
    %349 = vmatprep.subr.mxu0 0.0
    %350 = vmatpush2.msra.mxu0 %v121
    %351 = vmatprep.subr.mxu0 0.0
    %352 = vmatpush2.msra.mxu0 %v120
    %353 = vmatprep.mubr.f32.mxu0 %v38
    %354 = vmatmul.mubr.f32.gmra.mxu0 %v37
    %v355 = vpop.f32.mrf.mxu0
    %v356 = vadd.f32 %v286, %v355
    %v357 = vpop.f32.mrf.mxu0
    %358 = vdwg.mxu0
    %359 = vmatprep.subr.mxu0 0.0
    %360 = vmatpush1.msra.mxu0 0.0
    %361 = vmatprep.subr.mxu0 0.0
    %362 = vmatpush1.msra.mxu0 0.0
    %363 = vmatprep.subr.mxu0 0.0
    %364 = vmatpush1.msra.mxu0 0.0
    %365 = vmatprep.subr.mxu0 0.0
    %366 = vmatpush1.msra.mxu0 0.0
    %367 = vmatprep.subr.mxu0 0.0
    %368 = vmatpush1.msra.mxu0 0.0
    %369 = vmatprep.subr.mxu0 0.0
    %370 = vmatpush1.msra.mxu0 0.0
    %371 = vmatprep.subr.mxu0 0.0
    %372 = vmatpush1.msra.mxu0 0.0
    %373 = vmatprep.subr.mxu0 0.0
    %374 = vmatpush1.msra.mxu0 0.0
    %375 = vmatprep.subr.mxu0 0.0
    %376 = vmatpush1.msra.mxu0 0.0
    %377 = vmatprep.subr.mxu0 0.0
    %378 = vmatpush1.msra.mxu0 0.0
    %379 = vmatprep.subr.mxu0 0.0
    %380 = vmatpush1.msra.mxu0 0.0
    %381 = vmatprep.subr.mxu0 0.0
    %382 = vmatpush1.msra.mxu0 0.0
    %383 = vmatprep.subr.mxu0 0.0
    %384 = vmatpush1.msra.mxu0 0.0
    %385 = vmatprep.subr.mxu0 0.0
    %386 = vmatpush1.msra.mxu0 0.0
    %387 = vmatprep.subr.mxu0 0.0
    %388 = vmatpush1.msra.mxu0 %v137
    %389 = vmatprep.subr.mxu0 0.0
    %390 = vmatpush1.msra.mxu0 %v136
    %391 = vmatprep.subr.mxu0 0.0
    %392 = vmatpush2.msra.mxu0 0.0
    %393 = vmatprep.subr.mxu0 0.0
    %394 = vmatpush2.msra.mxu0 0.0
    %395 = vmatprep.subr.mxu0 0.0
    %396 = vmatpush2.msra.mxu0 0.0
    %397 = vmatprep.subr.mxu0 0.0
    %398 = vmatpush2.msra.mxu0 0.0
    %399 = vmatprep.subr.mxu0 0.0
    %400 = vmatpush2.msra.mxu0 0.0
    %401 = vmatprep.subr.mxu0 0.0
    %402 = vmatpush2.msra.mxu0 0.0
    %403 = vmatprep.subr.mxu0 0.0
    %404 = vmatpush2.msra.mxu0 0.0
    %405 = vmatprep.subr.mxu0 0.0
    %406 = vmatpush2.msra.mxu0 0.0
    %407 = vmatprep.subr.mxu0 0.0
    %408 = vmatpush2.msra.mxu0 0.0
    %409 = vmatprep.subr.mxu0 0.0
    %410 = vmatpush2.msra.mxu0 0.0
    %411 = vmatprep.subr.mxu0 0.0
    %412 = vmatpush2.msra.mxu0 0.0
    %413 = vmatprep.subr.mxu0 0.0
    %414 = vmatpush2.msra.mxu0 0.0
    %415 = vmatprep.subr.mxu0 0.0
    %416 = vmatpush2.msra.mxu0 0.0
    %417 = vmatprep.subr.mxu0 0.0
    %418 = vmatpush2.msra.mxu0 0.0
    %419 = vmatprep.subr.mxu0 0.0
    %420 = vmatpush2.msra.mxu0 0.0
    %421 = vmatprep.subr.mxu0 0.0
    %422 = vmatpush2.msra.mxu0 0.0
    %423 = vmatprep.mubr.f32.mxu0 0.0
    %424 = vmatmul.mubr.f32.gmra.mxu0 %v147
    %v425 = vpop.f32.mrf.mxu0
    %v426 = vadd.f32 %v356, %v425
    %v427 = vpop.f32.mrf.mxu0
    %428 = vdwg.mxu0
    %v429 = vmax.f32 %v426, 0.0
    %v430 = vld [vmem:[%s3] sm:$0xff]
    %v431 = vld [vmem:[%s3 + $0x8] sm:$0xff]
    %v432 = vld [vmem:[%s3 + $0x10] sm:$0xff]
    %v433 = vld [vmem:[%s3 + $0x18] sm:$0xff]
    %v434 = vld [vmem:[%s3 + $0x20] sm:$0xff]
    %v435 = vld [vmem:[%s3 + $0x28] sm:$0xff]
    %v436 = vld [vmem:[%s3 + $0x30] sm:$0xff]
    %v437 = vld [vmem:[%s3 + $0x38] sm:$0xff]
    %v438 = vld [vmem:[%s3 + $0x40] sm:$0xff]
    %v439 = vld [vmem:[%s3 + $0x48] sm:$0xff]
    %v440 = vld [vmem:[%s3 + $0x50] sm:$0xff]
    %v441 = vld [vmem:[%s3 + $0x58] sm:$0xff]
    %v442 = vld [vmem:[%s3 + $0x60] sm:$0xff]
    %v443 = vld [vmem:[%s3 + $0x68] sm:$0xff]
    %v444 = vld [vmem:[%s3 + $0x70] sm:$0xff]
    %v445 = vld [vmem:[%s3 + $0x78] sm:$0xff]
    %v446 = vld [vmem:[%s4] sm:$0x1]
    %v448 = vlaneseq
    %v449 = vshrl.u32 %v448, 7
    %v450 = vsub.s32 0, %v449
    %v451 = vrot.slane %v446, %v450
    %453 = vmatprep.subr.mxu0 0.0
    %454 = vmatpush1.msra.mxu0 %v445
    %455 = vmatprep.subr.mxu0 0.0
    %456 = vmatpush1.msra.mxu0 %v444
    %457 = vmatprep.subr.mxu0 0.0
    %458 = vmatpush1.msra.mxu0 %v443
    %459 = vmatprep.subr.mxu0 0.0
    %460 = vmatpush1.msra.mxu0 %v442
    %461 = vmatprep.subr.mxu0 0.0
    %462 = vmatpush1.msra.mxu0 %v441
    %463 = vmatprep.subr.mxu0 0.0
    %464 = vmatpush1.msra.mxu0 %v440
    %465 = vmatprep.subr.mxu0 0.0
    %466 = vmatpush1.msra.mxu0 %v439
    %467 = vmatprep.subr.mxu0 0.0
    %468 = vmatpush1.msra.mxu0 %v438
    %469 = vmatprep.subr.mxu0 0.0
    %470 = vmatpush1.msra.mxu0 %v437
    %471 = vmatprep.subr.mxu0 0.0
    %472 = vmatpush1.msra.mxu0 %v436
    %473 = vmatprep.subr.mxu0 0.0
    %474 = vmatpush1.msra.mxu0 %v435
    %475 = vmatprep.subr.mxu0 0.0
    %476 = vmatpush1.msra.mxu0 %v434
    %477 = vmatprep.subr.mxu0 0.0
    %478 = vmatpush1.msra.mxu0 %v433
    %479 = vmatprep.subr.mxu0 0.0
    %480 = vmatpush1.msra.mxu0 %v432
    %481 = vmatprep.subr.mxu0 0.0
    %482 = vmatpush1.msra.mxu0 %v431
    %483 = vmatprep.subr.mxu0 0.0
    %484 = vmatpush1.msra.mxu0 %v430
    %485 = vmatprep.subr.mxu0 0.0
    %486 = vmatpush2.msra.mxu0 0.0
    %487 = vmatprep.subr.mxu0 0.0
    %488 = vmatpush2.msra.mxu0 0.0
    %489 = vmatprep.subr.mxu0 0.0
    %490 = vmatpush2.msra.mxu0 0.0
    %491 = vmatprep.subr.mxu0 0.0
    %492 = vmatpush2.msra.mxu0 0.0
    %493 = vmatprep.subr.mxu0 0.0
    %494 = vmatpush2.msra.mxu0 0.0
    %495 = vmatprep.subr.mxu0 0.0
    %496 = vmatpush2.msra.mxu0 0.0
    %497 = vmatprep.subr.mxu0 0.0
    %498 = vmatpush2.msra.mxu0 0.0
    %499 = vmatprep.subr.mxu0 0.0
    %500 = vmatpush2.msra.mxu0 0.0
    %501 = vmatprep.subr.mxu0 0.0
    %502 = vmatpush2.msra.mxu0 0.0
    %503 = vmatprep.subr.mxu0 0.0
    %504 = vmatpush2.msra.mxu0 0.0
    %505 = vmatprep.subr.mxu0 0.0
    %506 = vmatpush2.msra.mxu0 0.0
    %507 = vmatprep.subr.mxu0 0.0
    %508 = vmatpush2.msra.mxu0 0.0
    %509 = vmatprep.subr.mxu0 0.0
    %510 = vmatpush2.msra.mxu0 0.0
    %511 = vmatprep.subr.mxu0 0.0
    %512 = vmatpush2.msra.mxu0 0.0
    %513 = vmatprep.subr.mxu0 0.0
    %514 = vmatpush2.msra.mxu0 0.0
    %515 = vmatprep.subr.mxu0 0.0
    %516 = vmatpush2.msra.mxu0 0.0
    %517 = vmatprep.mubr.f32.mxu0 0.0
    %518 = vmatmul.mubr.f32.gmra.mxu0 %v429
    %v519 = vpop.f32.mrf.mxu0
    %v520 = vadd.f32 %v451, %v519
    %v521 = vpop.f32.mrf.mxu0
    %522 = vdwg.mxu0
    %v523 = vmax.f32 %v520, 0.0
    %v524 = vld [vmem:[%s5] sm:$0xff]
    %v525 = vld [vmem:[%s5 + $0x8] sm:$0xff]
    %v526 = vld [vmem:[%s5 + $0x10] sm:$0xff]
    %v527 = vld [vmem:[%s5 + $0x18] sm:$0xff]
    %v528 = vld [vmem:[%s5 + $0x20] sm:$0xff]
    %v529 = vld [vmem:[%s5 + $0x28] sm:$0xff]
    %v530 = vld [vmem:[%s5 + $0x30] sm:$0xff]
    %v531 = vld [vmem:[%s5 + $0x38] sm:$0xff]
    %v532 = vld [vmem:[%s5 + $0x40] sm:$0xff]
    %v533 = vld [vmem:[%s5 + $0x48] sm:$0xff]
    %v534 = vld [vmem:[%s5 + $0x50] sm:$0xff]
    %v535 = vld [vmem:[%s5 + $0x58] sm:$0xff]
    %v536 = vld [vmem:[%s5 + $0x60] sm:$0xff]
    %v537 = vld [vmem:[%s5 + $0x68] sm:$0xff]
    %v538 = vld [vmem:[%s5 + $0x70] sm:$0xff]
    %v539 = vld [vmem:[%s5 + $0x78] sm:$0xff]
    %v540 = vld [vmem:[%s6] sm:$0x1]
    %v542 = vlaneseq
    %v543 = vshrl.u32 %v542, 7
    %v544 = vsub.s32 0, %v543
    %v545 = vrot.slane %v540, %v544
    %547 = vmatprep.subr.mxu0 0.0
    %548 = vmatpush1.msra.mxu0 %v539
    %549 = vmatprep.subr.mxu0 0.0
    %550 = vmatpush1.msra.mxu0 %v538
    %551 = vmatprep.subr.mxu0 0.0
    %552 = vmatpush1.msra.mxu0 %v537
    %553 = vmatprep.subr.mxu0 0.0
    %554 = vmatpush1.msra.mxu0 %v536
    %555 = vmatprep.subr.mxu0 0.0
    %556 = vmatpush1.msra.mxu0 %v535
    %557 = vmatprep.subr.mxu0 0.0
    %558 = vmatpush1.msra.mxu0 %v534
    %559 = vmatprep.subr.mxu0 0.0
    %560 = vmatpush1.msra.mxu0 %v533
    %561 = vmatprep.subr.mxu0 0.0
    %562 = vmatpush1.msra.mxu0 %v532
    %563 = vmatprep.subr.mxu0 0.0
    %564 = vmatpush1.msra.mxu0 %v531
    %565 = vmatprep.subr.mxu0 0.0
    %566 = vmatpush1.msra.mxu0 %v530
    %567 = vmatprep.subr.mxu0 0.0
    %568 = vmatpush1.msra.mxu0 %v529
    %569 = vmatprep.subr.mxu0 0.0
    %570 = vmatpush1.msra.mxu0 %v528
    %571 = vmatprep.subr.mxu0 0.0
    %572 = vmatpush1.msra.mxu0 %v527
    %573 = vmatprep.subr.mxu0 0.0
    %574 = vmatpush1.msra.mxu0 %v526
    %575 = vmatprep.subr.mxu0 0.0
    %576 = vmatpush1.msra.mxu0 %v525
    %577 = vmatprep.subr.mxu0 0.0
    %578 = vmatpush1.msra.mxu0 %v524
    %579 = vmatprep.subr.mxu0 0.0
    %580 = vmatpush2.msra.mxu0 0.0
    %581 = vmatprep.subr.mxu0 0.0
    %582 = vmatpush2.msra.mxu0 0.0
    %583 = vmatprep.subr.mxu0 0.0
    %584 = vmatpush2.msra.mxu0 0.0
    %585 = vmatprep.subr.mxu0 0.0
    %586 = vmatpush2.msra.mxu0 0.0
    %587 = vmatprep.subr.mxu0 0.0
    %588 = vmatpush2.msra.mxu0 0.0
    %589 = vmatprep.subr.mxu0 0.0
    %590 = vmatpush2.msra.mxu0 0.0
    %591 = vmatprep.subr.mxu0 0.0
    %592 = vmatpush2.msra.mxu0 0.0
    %593 = vmatprep.subr.mxu0 0.0
    %594 = vmatpush2.msra.mxu0 0.0
    %595 = vmatprep.subr.mxu0 0.0
    %596 = vmatpush2.msra.mxu0 0.0
    %597 = vmatprep.subr.mxu0 0.0
    %598 = vmatpush2.msra.mxu0 0.0
    %599 = vmatprep.subr.mxu0 0.0
    %600 = vmatpush2.msra.mxu0 0.0
    %601 = vmatprep.subr.mxu0 0.0
    %602 = vmatpush2.msra.mxu0 0.0
    %603 = vmatprep.subr.mxu0 0.0
    %604 = vmatpush2.msra.mxu0 0.0
    %605 = vmatprep.subr.mxu0 0.0
    %606 = vmatpush2.msra.mxu0 0.0
    %607 = vmatprep.subr.mxu0 0.0
    %608 = vmatpush2.msra.mxu0 0.0
    %609 = vmatprep.subr.mxu0 0.0
    %610 = vmatpush2.msra.mxu0 0.0
    %611 = vmatprep.mubr.f32.mxu0 0.0
    %612 = vmatmul.mubr.f32.gmra.mxu0 %v523
    %v613 = vpop.f32.mrf.mxu0
    %v614 = vadd.f32 %v545, %v613
    %v615 = vpop.f32.mrf.mxu0
    %616 = vdwg.mxu0
    %v617 = vmax.f32 %v614, 0.0
    %v618 = vld [vmem:[%s7] sm:$0xff]
    %v619 = vld [vmem:[%s7 + $0x8] sm:$0xff]
    %v620 = vld [vmem:[%s7 + $0x10] sm:$0xff]
    %v621 = vld [vmem:[%s7 + $0x18] sm:$0xff]
    %v622 = vld [vmem:[%s7 + $0x20] sm:$0xff]
    %v623 = vld [vmem:[%s7 + $0x28] sm:$0xff]
    %v624 = vld [vmem:[%s7 + $0x30] sm:$0xff]
    %v625 = vld [vmem:[%s7 + $0x38] sm:$0xff]
    %v626 = vld [vmem:[%s7 + $0x40] sm:$0xff]
    %v627 = vld [vmem:[%s7 + $0x48] sm:$0xff]
    %v628 = vld [vmem:[%s7 + $0x50] sm:$0xff]
    %v629 = vld [vmem:[%s7 + $0x58] sm:$0xff]
    %v630 = vld [vmem:[%s7 + $0x60] sm:$0xff]
    %v631 = vld [vmem:[%s7 + $0x68] sm:$0xff]
    %v632 = vld [vmem:[%s7 + $0x70] sm:$0xff]
    %v633 = vld [vmem:[%s7 + $0x78] sm:$0xff]
    %v634 = vld [vmem:[%s8] sm:$0x1]
    %v636 = vlaneseq
    %v637 = vshrl.u32 %v636, 7
    %v638 = vsub.s32 0, %v637
    %v639 = vrot.slane %v634, %v638
    %641 = vmatprep.subr.mxu0 0.0
    %642 = vmatpush1.msra.mxu0 %v633
    %643 = vmatprep.subr.mxu0 0.0
    %644 = vmatpush1.msra.mxu0 %v632
    %645 = vmatprep.subr.mxu0 0.0
    %646 = vmatpush1.msra.mxu0 %v631
    %647 = vmatprep.subr.mxu0 0.0
    %648 = vmatpush1.msra.mxu0 %v630
    %649 = vmatprep.subr.mxu0 0.0
    %650 = vmatpush1.msra.mxu0 %v629
    %651 = vmatprep.subr.mxu0 0.0
    %652 = vmatpush1.msra.mxu0 %v628
    %653 = vmatprep.subr.mxu0 0.0
    %654 = vmatpush1.msra.mxu0 %v627
    %655 = vmatprep.subr.mxu0 0.0
    %656 = vmatpush1.msra.mxu0 %v626
    %657 = vmatprep.subr.mxu0 0.0
    %658 = vmatpush1.msra.mxu0 %v625
    %659 = vmatprep.subr.mxu0 0.0
    %660 = vmatpush1.msra.mxu0 %v624
    %661 = vmatprep.subr.mxu0 0.0
    %662 = vmatpush1.msra.mxu0 %v623
    %663 = vmatprep.subr.mxu0 0.0
    %664 = vmatpush1.msra.mxu0 %v622
    %665 = vmatprep.subr.mxu0 0.0
    %666 = vmatpush1.msra.mxu0 %v621
    %667 = vmatprep.subr.mxu0 0.0
    %668 = vmatpush1.msra.mxu0 %v620
    %669 = vmatprep.subr.mxu0 0.0
    %670 = vmatpush1.msra.mxu0 %v619
    %671 = vmatprep.subr.mxu0 0.0
    %672 = vmatpush1.msra.mxu0 %v618
    %673 = vmatprep.subr.mxu0 0.0
    %674 = vmatpush2.msra.mxu0 0.0
    %675 = vmatprep.subr.mxu0 0.0
    %676 = vmatpush2.msra.mxu0 0.0
    %677 = vmatprep.subr.mxu0 0.0
    %678 = vmatpush2.msra.mxu0 0.0
    %679 = vmatprep.subr.mxu0 0.0
    %680 = vmatpush2.msra.mxu0 0.0
    %681 = vmatprep.subr.mxu0 0.0
    %682 = vmatpush2.msra.mxu0 0.0
    %683 = vmatprep.subr.mxu0 0.0
    %684 = vmatpush2.msra.mxu0 0.0
    %685 = vmatprep.subr.mxu0 0.0
    %686 = vmatpush2.msra.mxu0 0.0
    %687 = vmatprep.subr.mxu0 0.0
    %688 = vmatpush2.msra.mxu0 0.0
    %689 = vmatprep.subr.mxu0 0.0
    %690 = vmatpush2.msra.mxu0 0.0
    %691 = vmatprep.subr.mxu0 0.0
    %692 = vmatpush2.msra.mxu0 0.0
    %693 = vmatprep.subr.mxu0 0.0
    %694 = vmatpush2.msra.mxu0 0.0
    %695 = vmatprep.subr.mxu0 0.0
    %696 = vmatpush2.msra.mxu0 0.0
    %697 = vmatprep.subr.mxu0 0.0
    %698 = vmatpush2.msra.mxu0 0.0
    %699 = vmatprep.subr.mxu0 0.0
    %700 = vmatpush2.msra.mxu0 0.0
    %701 = vmatprep.subr.mxu0 0.0
    %702 = vmatpush2.msra.mxu0 0.0
    %703 = vmatprep.subr.mxu0 0.0
    %704 = vmatpush2.msra.mxu0 0.0
    %705 = vmatprep.mubr.f32.mxu0 0.0
    %706 = vmatmul.mubr.f32.gmra.mxu0 %v617
    %v707 = vpop.f32.mrf.mxu0
    %v708 = vadd.f32 %v639, %v707
    %v709 = vpop.f32.mrf.mxu0
    %710 = vdwg.mxu0
    %711 = vst [vmem:[#allocation2] sm:$0xff] %v708
    // Predicated region
    $region38: #{mlp_forward.1} parent=1 // pred_check
      _
    $region39: #{mlp_forward.1} parent=1 // pred_check_branch
      %713 = sbr.rel (0) target = $region41
    $region40: #{mlp_forward.1} parent=1 // pred_region
      %s715 = ssub.s32 128, 128
      %716 = vsyncadd [#allocation3], %s715
      %s718 = sshll.u32 [#allocation2], 4
      %s719 = int_to_ptr.vmem [resolvable:$true] %s718
      %721 = dma.vmem_to_hbm [thread:$0]  %s719, 128, %s9, [#allocation3]
    $region41: #{mlp_forward.1} parent=1 // pred_fallthru
      _
    // Predicated region
    $region42: #{mlp_forward.1} parent=1 // pred_check
      _
    $region43: #{mlp_forward.1} parent=1 // pred_check_branch
      %723 = sbr.rel (0) target = $region45
    $region44: #{mlp_forward.1} parent=1 // pred_region
      %724 = dma.done [#allocation3], 128
    $region45: #{mlp_forward.1} parent=1 // pred_fallthru
      _
    %725 = vsyncpa [#allocation3], 1

</llo_original>
